<compile_context>
chip_gen: v5e
topology: v5e:2x2
jax: 0.10.0
libtpu: 0.0.40
codegen_flags: <defaults>
</compile_context>

<pallas_src>
import jax
import jax.numpy as jnp
from jax.experimental import pallas as pl
from jax.experimental.pallas import tpu as pltpu


_M_UNROLL_LIMIT = 16          # above this many modalities, reduce over a grid axis
_DEFAULT_TILE_B = 512
_DEFAULT_TILE_D = 4096


# ---------------------------------------------------------------------------
# Kernels
# ---------------------------------------------------------------------------

def _make_slab_kernel(num_mod, d):
    """x arrives as one contiguous (tb, M*D) slab; per-modality slices are
    lane-aligned (D % 128 == 0) so they lower to plain offset loads."""

    def kernel(w_ref, x_ref, o_ref):
        acc = x_ref[:, 0:d].astype(jnp.float32) * w_ref[0]
        for m in range(1, num_mod):
            acc = acc + x_ref[:, m * d:(m + 1) * d].astype(jnp.float32) * w_ref[m]
        o_ref[...] = acc.astype(o_ref.dtype)

    return kernel


def _make_multispec_kernel(num_mod):
    """One (tb, td) VMEM tile per modality (separate operands over the same
    (B, M*D) view); unrolled scalar-weighted accumulate in f32."""

    def kernel(w_ref, *refs):
        x_refs, o_ref = refs[:num_mod], refs[num_mod]
        acc = x_refs[0][...].astype(jnp.float32) * w_ref[0]
        for m in range(1, num_mod):
            acc = acc + x_refs[m][...].astype(jnp.float32) * w_ref[m]
        o_ref[...] = acc.astype(o_ref.dtype)

    return kernel


def _reduce_kernel(w_ref, x_ref, o_ref, acc_ref):
    """Large-M path: grid axis 2 runs over modalities (reduction axis)."""
    m = pl.program_id(2)

    @pl.when(m == 0)
    def _():
        acc_ref[...] = jnp.zeros_like(acc_ref)

    acc_ref[...] += x_ref[...].astype(jnp.float32) * w_ref[m]

    @pl.when(m == pl.num_programs(2) - 1)
    def _():
        o_ref[...] = acc_ref[...].astype(o_ref.dtype)


def _fallback_kernel(w_ref, x_ref, o_ref):
    """D not a multiple of 128: keep the 3-D block (tb, M, D)."""
    num_mod = x_ref.shape[1]
    acc = x_ref[:, 0, :].astype(jnp.float32) * w_ref[0]
    for m in range(1, num_mod):
        acc = acc + x_ref[:, m, :].astype(jnp.float32) * w_ref[m]
    o_ref[...] = acc.astype(o_ref.dtype)


# ---------------------------------------------------------------------------
# Tile sizing helpers
# ---------------------------------------------------------------------------

def _vmem_capacity_bytes():
    try:
        return int(pltpu.get_tpu_info().vmem_capacity_bytes)
    except Exception:
        return 64 << 20          # assume the smallest (v7x: 64 MiB / TensorCore)


def _batch_tiles(batch, cap):
    """Legal batch-tile candidates, largest first (full batch, then 8-aligned)."""
    cands = []
    if batch <= cap:
        cands.append(batch)      # full batch is always a legal block size
    t = min(batch, cap)
    t -= t % 8
    while t >= 8:
        if t not in cands:
            cands.append(t)
        t //= 2
        t -= t % 8
    if not cands:
        cands.append(batch)      # batch < 8: full-dim block is the only legal one
    return cands


def _feature_tiles(d, cap):
    """Divisors of d that are multiples of 128, largest first (<= cap)."""
    hi = min(d, cap)
    hi -= hi % 128
    return [t for t in range(hi, 0, -128) if d % t == 0]


def _fit_tiles(batch, d, per_elem_bytes, budget, tile_b, tile_d):
    """Largest lane-dense (tb, td) whose pipeline footprint fits the budget.
    Prefers wide feature tiles (lane-dense stores, long DMA bursts)."""
    headroom = min(2 << 20, max(budget // 4, 1))
    limit = max(budget - headroom, 1)
    b_cands = _batch_tiles(batch, tile_b)
    for td in _feature_tiles(d, tile_d):
        for tb in b_cands:
            if per_elem_bytes * tb * td <= limit:
                return tb, td
    return _batch_tiles(batch, 8)[-1], 128   # pathological budget: smallest tile


def _ensure_two_blocks(batch, d, tb, td):
    """If the batch grid collapses to one block, split the feature axis so a
    2-TensorCore chip (v7x) still gets >= 2 parallel blocks."""
    if pl.cdiv(batch, tb) == 1 and td == d:
        smaller = _feature_tiles(d, d // 2)
        if smaller:
            td = smaller[0]
    return tb, td


# ---------------------------------------------------------------------------
# Public wrapper
# ---------------------------------------------------------------------------

def learnable_weighted_sum(x, weights, *, tile_b=_DEFAULT_TILE_B,
                           tile_d=_DEFAULT_TILE_D, max_vmem_bytes=None):
    """x: (B, M, D), weights: (M,) -> (B, D); matches the PyTorch module."""
    assert x.ndim == 3, x.shape
    B, M, D = x.shape
    assert weights.shape == (M,), (weights.shape, M)

    itemsize = jnp.dtype(x.dtype).itemsize

    # Hoisted softmax: O(M) constant work done once, outside the kernel grid.
    w_sm = jax.nn.softmax(weights.astype(jnp.float32), axis=0)       # (M,)

    cap_phys = _vmem_capacity_bytes()
    if max_vmem_bytes is None:
        budget = min(cap_phys * 3 // 4, 96 << 20)    # v7x ~48 MiB, v5e/v6e 96 MiB
    else:
        budget = int(max_vmem_bytes)
    vmem_limit = int(min(max(budget, 32 << 20), cap_phys * 7 // 8))

    cost = pl.CostEstimate(
        flops=2 * B * M * D,
        transcendentals=0,
        bytes_accessed=(B * M * D + B * D) * itemsize + M * 4,
    )

    def _cparams(sem):
        return pltpu.CompilerParams(dimension_semantics=sem,
                                    vmem_limit_bytes=vmem_limit)

    out_shape = jax.ShapeDtypeStruct((B, D), x.dtype)

    # ---- Path D: feature dim not lane-aligned -> keep the 3-D block. -------
    if D % 128 != 0:
        sub = {4: 8, 2: 16, 1: 32}.get(itemsize, 8)
        m_pad = -(-M // sub) * sub
        d_pad = -(-D // 128) * 128
        per_row = 2 * (m_pad + 1) * d_pad * itemsize     # dbl-buffered in + out
        tb = next((t for t in _batch_tiles(B, tile_b) if t * per_row <= budget),
                  _batch_tiles(B, 8)[-1])
        return pl.pallas_call(
            _fallback_kernel,
            out_shape=out_shape,
            grid_spec=pltpu.PrefetchScalarGridSpec(
                num_scalar_prefetch=1,
                grid=(pl.cdiv(B, tb),),
                in_specs=[pl.BlockSpec((tb, M, D), lambda b, w: (b, 0, 0))],
                out_specs=pl.BlockSpec((tb, D), lambda b, w: (b, 0)),
            ),
            compiler_params=_cparams(("parallel",)),
            cost_estimate=cost,
        )(w_sm, x)

    # Lane-aligned feature dim: work on the free, contiguous (B, M*D) view so
    # the tiny M reduction never lands on the sublane axis.
    x2d = x.reshape(B, M * D)

    # ---- Path C: many modalities -> reduction grid axis over M. ------------
    if M > _M_UNROLL_LIMIT:
        per_elem = 4 * itemsize + 4          # 2x x-tile + 2x out-tile + f32 acc
        tb, td = _fit_tiles(B, D, per_elem, budget, tile_b, tile_d)
        tb, td = _ensure_two_blocks(B, D, tb, td)
        nd = D // td
        return pl.pallas_call(
            _reduce_kernel,
            out_shape=out_shape,
            grid_spec=pltpu.PrefetchScalarGridSpec(
                num_scalar_prefetch=1,
                grid=(pl.cdiv(B, tb), nd, M),
                in_specs=[pl.BlockSpec((tb, td),
                                       lambda b, d, m, w: (b, m * nd + d))],
                out_specs=pl.BlockSpec((tb, td), lambda b, d, m, w: (b, d)),
                scratch_shapes=[pltpu.VMEM((tb, td), jnp.float32)],
            ),
            compiler_params=_cparams(("parallel", "parallel", "arbitrary")),
            cost_estimate=cost,
        )(w_sm, x2d)

    # ---- Paths A/B: unrolled M. ---------------------------------------------
    per_elem = 2 * (M + 1) * itemsize        # dbl-buffered x (all M) + out tile
    tb, td = _fit_tiles(B, D, per_elem, budget, tile_b, tile_d)
    tb, td = _ensure_two_blocks(B, D, tb, td)
    nb, nd = pl.cdiv(B, tb), D // td

    if td == D:
        # Path A: one contiguous (tb, M*D) slab per step -> longest HBM bursts.
        return pl.pallas_call(
            _make_slab_kernel(M, D),
            out_shape=out_shape,
            grid_spec=pltpu.PrefetchScalarGridSpec(
                num_scalar_prefetch=1,
                grid=(nb,),
                in_specs=[pl.BlockSpec((tb, M * D), lambda b, w: (b, 0))],
                out_specs=pl.BlockSpec((tb, D), lambda b, w: (b, 0)),
            ),
            compiler_params=_cparams(("parallel",)),
            cost_estimate=cost,
        )(w_sm, x2d)

    # Path B: full-D slab does not fit -> M per-modality (tb, td) tiles.
    # (pipeline_mode=pl.Buffered(3) on these specs is a sweepable knob.)
    in_specs = [
        pl.BlockSpec((tb, td), lambda b, d, w, m=m: (b, m * nd + d))
        for m in range(M)
    ]
    return pl.pallas_call(
        _make_multispec_kernel(M),
        out_shape=out_shape,
        grid_spec=pltpu.PrefetchScalarGridSpec(
            num_scalar_prefetch=1,
            grid=(nb, nd),
            in_specs=in_specs,
            out_specs=pl.BlockSpec((tb, td), lambda b, d, w: (b, d)),
        ),
        compiler_params=_cparams(("parallel", "parallel")),
        cost_estimate=cost,
    )(w_sm, *([x2d] * M))


def _reference(x, weights):
    w = jax.nn.softmax(weights.astype(jnp.float32), axis=0)
    return (x.astype(jnp.float32) * w[None, :, None]).sum(axis=1).astype(x.dtype)


if __name__ == "__main__":
    key = jax.random.PRNGKey(0)
    ks = jax.random.split(key, 6)

    def check(x, w, **kw):
        out = jax.block_until_ready(learnable_weighted_sum(x, w, **kw))
        ref = _reference(x, w)
        assert out.shape == ref.shape, (out.shape, ref.shape)
        assert jnp.allclose(out, ref, atol=1e-5, rtol=1e-5), "mismatch vs reference"

    # 1) Small shape consistent with the module (batch=2, num_modalities=4, D=256).
    w4 = jnp.ones((4,), jnp.float32) + 0.01 * jnp.arange(4, dtype=jnp.float32)
    x = jax.random.normal(ks[0], (2, 4, 256), dtype=jnp.float32)
    check(x, w4)

    # 2) Ragged batch, tiled over B -> contiguous single-slab path.
    x = jax.random.normal(ks[1], (50, 4, 2048), dtype=jnp.float32)
    check(x, w4, tile_b=32)

    # 3) Tight VMEM budget forces the per-modality feature-tiled path.
    x = jax.random.normal(ks[2], (16, 4, 2048), dtype=jnp.float32)
    check(x, w4, max_vmem_bytes=512 << 10)

    # 4) Many modalities -> reduction grid axis path with f32 accumulator.
    w24 = 0.05 * jnp.arange(24, dtype=jnp.float32)
    x = jax.random.normal(ks[3], (8, 24, 256), dtype=jnp.float32)
    check(x, w24)

    # 5) Feature dim not a multiple of 128 -> 3-D fallback path.
    w3 = jnp.array([0.5, 1.0, 1.5], jnp.float32)
    x = jax.random.normal(ks[4], (4, 3, 192), dtype=jnp.float32)
    check(x, w3)

    print("KERNEL_OK")
</pallas_src>

<mosaic_0001>
module attributes {stable_mosaic.version = 11 : i64} {
  func.func @kernel(%arg0: i32, %arg1: i32, %arg2: memref<4xf32, #tpu.memory_space<smem>>, %arg3: memref<2x128xf32, #tpu.memory_space<vmem>>, %arg4: memref<2x128xf32, #tpu.memory_space<vmem>>, %arg5: memref<2x128xf32, #tpu.memory_space<vmem>>, %arg6: memref<2x128xf32, #tpu.memory_space<vmem>>, %arg7: memref<2x128xf32, #tpu.memory_space<vmem>>) attributes {dimension_semantics = [#tpu.dimension_semantics<parallel>, #tpu.dimension_semantics<parallel>], iteration_bounds = array<i64: 1, 2>, scalar_prefetch = 1 : i64, scratch_operands = 0 : i64, tpu.core_type = #tpu.core_type<tc>, window_params = [{transform_indices = @transform_0, window_bounds = array<i64: 2, 128>}, {transform_indices = @transform_1, window_bounds = array<i64: 2, 128>}, {transform_indices = @transform_2, window_bounds = array<i64: 2, 128>}, {transform_indices = @transform_3, window_bounds = array<i64: 2, 128>}, {transform_indices = @transform_4, window_bounds = array<i64: 2, 128>}]} {
    %c0 = arith.constant 0 : index
    %c0_0 = arith.constant 0 : index
    %0 = vector.load %arg3[%c0, %c0_0] : memref<2x128xf32, #tpu.memory_space<vmem>>, vector<2x128xf32>
    %c0_1 = arith.constant 0 : index
    %1 = memref.load %arg2[%c0_1] : memref<4xf32, #tpu.memory_space<smem>>
    %2 = vector.broadcast %1 : f32 to vector<2x128xf32>
    %3 = arith.mulf %0, %2 : vector<2x128xf32>
    %c0_2 = arith.constant 0 : index
    %c0_3 = arith.constant 0 : index
    %4 = vector.load %arg4[%c0_2, %c0_3] : memref<2x128xf32, #tpu.memory_space<vmem>>, vector<2x128xf32>
    %c1 = arith.constant 1 : index
    %5 = memref.load %arg2[%c1] : memref<4xf32, #tpu.memory_space<smem>>
    %6 = vector.broadcast %5 : f32 to vector<2x128xf32>
    %7 = arith.mulf %4, %6 : vector<2x128xf32>
    %8 = arith.addf %3, %7 : vector<2x128xf32>
    %c0_4 = arith.constant 0 : index
    %c0_5 = arith.constant 0 : index
    %9 = vector.load %arg5[%c0_4, %c0_5] : memref<2x128xf32, #tpu.memory_space<vmem>>, vector<2x128xf32>
    %c2 = arith.constant 2 : index
    %10 = memref.load %arg2[%c2] : memref<4xf32, #tpu.memory_space<smem>>
    %11 = vector.broadcast %10 : f32 to vector<2x128xf32>
    %12 = arith.mulf %9, %11 : vector<2x128xf32>
    %13 = arith.addf %8, %12 : vector<2x128xf32>
    %c0_6 = arith.constant 0 : index
    %c0_7 = arith.constant 0 : index
    %14 = vector.load %arg6[%c0_6, %c0_7] : memref<2x128xf32, #tpu.memory_space<vmem>>, vector<2x128xf32>
    %c3 = arith.constant 3 : index
    %15 = memref.load %arg2[%c3] : memref<4xf32, #tpu.memory_space<smem>>
    %16 = vector.broadcast %15 : f32 to vector<2x128xf32>
    %17 = arith.mulf %14, %16 : vector<2x128xf32>
    %18 = arith.addf %13, %17 : vector<2x128xf32>
    %c0_8 = arith.constant 0 : index
    %c0_9 = arith.constant 0 : index
    %19 = vector.load %arg7[%c0_8, %c0_9] : memref<2x128xf32, #tpu.memory_space<vmem>>, vector<2x128xf32>
    tpu.vector_store %arg7[%c0_8, %c0_9], %18 {strides = array<i32>} : memref<2x128xf32, #tpu.memory_space<vmem>>, vector<2x128xf32>,
    return
  }
  func.func @transform_0(%arg0: i32, %arg1: i32, %arg2: memref<4xf32, #tpu.memory_space<smem>>) -> (i32, i32) {
    %c0_i32 = arith.constant 0 : i32
    %0 = arith.addi %c0_i32, %arg1 : i32
    %c0_i32_0 = arith.constant 0 : i32
    return %arg0, %0 : i32, i32
  }
  func.func @transform_1(%arg0: i32, %arg1: i32, %arg2: memref<4xf32, #tpu.memory_space<smem>>) -> (i32, i32) {
    %c2_i32 = arith.constant 2 : i32
    %0 = arith.addi %c2_i32, %arg1 : i32
    %c0_i32 = arith.constant 0 : i32
    return %arg0, %0 : i32, i32
  }
  func.func @transform_2(%arg0: i32, %arg1: i32, %arg2: memref<4xf32, #tpu.memory_space<smem>>) -> (i32, i32) {
    %c4_i32 = arith.constant 4 : i32
    %0 = arith.addi %c4_i32, %arg1 : i32
    %c0_i32 = arith.constant 0 : i32
    return %arg0, %0 : i32, i32
  }
  func.func @transform_3(%arg0: i32, %arg1: i32, %arg2: memref<4xf32, #tpu.memory_space<smem>>) -> (i32, i32) {
    %c6_i32 = arith.constant 6 : i32
    %0 = arith.addi %c6_i32, %arg1 : i32
    %c0_i32 = arith.constant 0 : i32
    return %arg0, %0 : i32, i32
  }
  func.func @transform_4(%arg0: i32, %arg1: i32, %arg2: memref<4xf32, #tpu.memory_space<smem>>) -> (i32, i32) {
    %c0_i32 = arith.constant 0 : i32
    return %arg0, %arg1 : i32, i32
  }
}

</mosaic_0001>

<llo_original>
// kernel: tpu_custom_call.1
$region0: #{tpu_custom_call.1}
  #allocation0 [shape = 'u32[]', space=smem, size = 0x4, offset = 0x4, fixed_abs, tag = 'smem constant byte address 0x4 - core index']
  #allocation1 [shape = 'u32[72,128]{1,0:T(1,128)}', space=vmem, size = 0x9000, scoped, tag = 'internal scratch']
  #allocation2 [shape = 's32[1]{0}', space=sflag, size = 0x4, scoped, tag = 'scoped memory for tpu_custom_call.1']
  #allocation3 [shape = 'u8[512]{0}', space=smem, size = 0x200, scoped, tag = 'prefetched SMEM operand 0']
  %s0 = inlined_call_operand.hbm [shape: f32[4], index: 0, kind: input, shape index: {}]
  %s1 = inlined_call_operand.hbm [shape: f32[2,1024], index: 1, kind: input, shape index: {}]
  %s2 = inlined_call_operand.hbm [shape: f32[2,1024], index: 2, kind: input, shape index: {}]
  %s3 = inlined_call_operand.hbm [shape: f32[2,1024], index: 3, kind: input, shape index: {}]
  %s4 = inlined_call_operand.hbm [shape: f32[2,1024], index: 4, kind: input, shape index: {}]
  %s5 = inlined_call_operand.hbm [shape: f32[2,256], index: 5, kind: output, shape index: {}]
  %s6 = sld [smem:[#allocation0]]
  $region65: #{tpu_custom_call.1} parent=0
    _
  %s8 = ssub.s32 1, %s6
  %s9 = scalar_select 0, %s8, %s6
  %s11 = sshll.u32 %s0, 4
  %s12 = int_to_ptr.hbm [resolvable:$true] %s11
  %14 = dma.hbm_to_smem %s12, 16, [#allocation3], [#allocation2]
  %16 = dma.done [#allocation2], 16
  %17 = sfence
  $region1: #{tpu_custom_call.1} parent=0
    #allocation4 [shape = 'u8[2048]{0}', space=vmem, size = 0x800, scoped, tag = 'input window, operand 1']
    #allocation5 [shape = 's32[2]{0}', space=sflag, size = 0x8, scoped, tag = 'scoped memory for tpu_custom_call.1']
    #allocation6 [shape = 's32[2]{0}', space=sflag, size = 0x8, scoped, tag = 'scoped memory for tpu_custom_call.1']
    #allocation7 [shape = 'u8[2048]{0}', space=vmem, size = 0x800, scoped, tag = 'input window, operand 2']
    #allocation8 [shape = 's32[2]{0}', space=sflag, size = 0x8, scoped, tag = 'scoped memory for tpu_custom_call.1']
    #allocation9 [shape = 'u8[2048]{0}', space=vmem, size = 0x800, scoped, tag = 'input window, operand 3']
    #allocation10 [shape = 'u8[2048]{0}', space=vmem, size = 0x800, scoped, tag = 'input window, operand 4']
    #allocation11 [shape = 's32[2]{0}', space=sflag, size = 0x8, scoped, tag = 'scoped memory for tpu_custom_call.1']
    #allocation12 [shape = 'u8[2048]{0}', space=vmem, size = 0x800, scoped, tag = 'output window, operand 0']
    %18 = vsyncpa [#allocation5], 0
    %s19 = scalar_lea.sflag [#allocation5], 1
    %20 = vsyncpa %s19, 0
    %21 = vsyncpa [#allocation8], 0
    %s22 = scalar_lea.sflag [#allocation8], 1
    %23 = vsyncpa %s22, 0
    %24 = vsyncpa [#allocation11], 0
    %s25 = scalar_lea.sflag [#allocation11], 1
    %26 = vsyncpa %s25, 0
    %27 = vsyncpa [#allocation6], 0
    %s28 = scalar_lea.sflag [#allocation6], 1
    %29 = vsyncpa %s28, 0
    loop: start=0, step=1, limit=4
    $region2: #{tpu_custom_call.1} parent=1 // loop_pre_header
      _
    $region3: #{tpu_custom_call.1} parent=1 // loop_header
      %s31 = sphi 0, %s35
      %p32 = scmp.ge.s32.totalorder %s31, 4
      %s38 = sphi 0, %s50
      %s39 = sphi 0, %s46
      %s40 = sphi 0, %s38
      %s41 = sphi 0, %s39
      %s42 = sphi 0, %s40
      %s43 = sphi 0, %s41
      %s55 = sphi 0, %s57
      %s58 = sphi 0, %s55
      %s59 = sphi 0, %s58
      %s75 = sphi 0, %s59
      %s85 = sphi 0, %s87
      %s88 = sphi 0, %s85
      %s89 = sphi 0, %s88
      %s105 = sphi 0, %s89
      %s115 = sphi 0, %s117
      %s118 = sphi 0, %s115
      %s119 = sphi 0, %s118
      %s135 = sphi 0, %s119
      %s145 = sphi 0, %s147
      %s148 = sphi 0, %s145
      %s149 = sphi 0, %s148
      %s165 = sphi 0, %s149
      %s173 = sphi 0, %s175
      %s176 = sphi 0, %s173
      %s177 = sphi 0, %s176
      %s193 = sphi 0, %s177
    $region4: #{tpu_custom_call.1} parent=1 // loop_header_branch
      %34 = sbr.rel (%p32) target = $region8
    $region5: #{tpu_custom_call.1} parent=1 // loop_body
      %s36 = ssub.s32 %s31, 1
      %s37 = ssub.s32 %s31, 2
      %s44 = sadd.s32 1, %s39
      %p45 = scmp.ge.s32.totalorder %s44, 2
      %s46 = scalar_select %p45, 0, %s44
      %s47 = sadd.s32 1, %s38
      %s48 = scalar_select %p45, %s47, %s38
      %p49 = scmp.ge.s32.totalorder %s48, 1
      %s50 = scalar_select %p49, 0, %s48
      %s51 = ssub.s32 %s38, %s50
      %s52 = ssub.s32 %s39, %s46
      %s53 = sor.u32 %s51, %s52
      %p54 = scmp.eq.s32.totalorder %s53, 0
      %s56 = sadd.s32 %s55, 1
      %s57 = scalar_select %p54, %s55, %s56
      %p60 = pneg %p54
      %p61 = scmp.eq.s32.totalorder %s31, 1
      %p62 = por %p60, %p61
      %p63 = scmp.ne.s32.totalorder %s55, %s58
      %p64 = scmp.eq.s32.totalorder %s31, 0
      %p65 = por %p63, %p64
      %p66 = scmp.ne.s32.totalorder %s55, %s58
      %p67 = scmp.eq.s32.totalorder %s36, 1
      %p68 = por %p66, %p67
      %p69 = scmp.ne.s32.totalorder %s58, %s59
      %p70 = scmp.eq.s32.totalorder %s36, 0
      %p71 = por %p69, %p70
      %p72 = scmp.ne.s32.totalorder %s58, %s59
      %p73 = scmp.eq.s32.totalorder %s37, 1
      %p74 = por %p72, %p73
      %p76 = scmp.ne.s32.totalorder %s59, %s75
      %p77 = scmp.eq.s32.totalorder %s37, 0
      %p78 = por %p76, %p77
      %s79 = sadd.s32 %s39, 2
      %s80 = sadd.s32 %s46, 2
      %s81 = ssub.s32 %s38, %s50
      %s82 = ssub.s32 %s79, %s80
      %s83 = sor.u32 %s81, %s82
      %p84 = scmp.eq.s32.totalorder %s83, 0
      %s86 = sadd.s32 %s85, 1
      %s87 = scalar_select %p84, %s85, %s86
      %p90 = pneg %p84
      %p91 = scmp.eq.s32.totalorder %s31, 1
      %p92 = por %p90, %p91
      %p93 = scmp.ne.s32.totalorder %s85, %s88
      %p94 = scmp.eq.s32.totalorder %s31, 0
      %p95 = por %p93, %p94
      %p96 = scmp.ne.s32.totalorder %s85, %s88
      %p97 = scmp.eq.s32.totalorder %s36, 1
      %p98 = por %p96, %p97
      %p99 = scmp.ne.s32.totalorder %s88, %s89
      %p100 = scmp.eq.s32.totalorder %s36, 0
      %p101 = por %p99, %p100
      %p102 = scmp.ne.s32.totalorder %s88, %s89
      %p103 = scmp.eq.s32.totalorder %s37, 1
      %p104 = por %p102, %p103
      %p106 = scmp.ne.s32.totalorder %s89, %s105
      %p107 = scmp.eq.s32.totalorder %s37, 0
      %p108 = por %p106, %p107
      %s109 = sadd.s32 %s39, 4
      %s110 = sadd.s32 %s46, 4
      %s111 = ssub.s32 %s38, %s50
      %s112 = ssub.s32 %s109, %s110
      %s113 = sor.u32 %s111, %s112
      %p114 = scmp.eq.s32.totalorder %s113, 0
      %s116 = sadd.s32 %s115, 1
      %s117 = scalar_select %p114, %s115, %s116
      %p120 = pneg %p114
      %p121 = scmp.eq.s32.totalorder %s31, 1
      %p122 = por %p120, %p121
      %p123 = scmp.ne.s32.totalorder %s115, %s118
      %p124 = scmp.eq.s32.totalorder %s31, 0
      %p125 = por %p123, %p124
      %p126 = scmp.ne.s32.totalorder %s115, %s118
      %p127 = scmp.eq.s32.totalorder %s36, 1
      %p128 = por %p126, %p127
      %p129 = scmp.ne.s32.totalorder %s118, %s119
      %p130 = scmp.eq.s32.totalorder %s36, 0
      %p131 = por %p129, %p130
      %p132 = scmp.ne.s32.totalorder %s118, %s119
      %p133 = scmp.eq.s32.totalorder %s37, 1
      %p134 = por %p132, %p133
      %p136 = scmp.ne.s32.totalorder %s119, %s135
      %p137 = scmp.eq.s32.totalorder %s37, 0
      %p138 = por %p136, %p137
      %s139 = sadd.s32 %s39, 6
      %s140 = sadd.s32 %s46, 6
      %s141 = ssub.s32 %s38, %s50
      %s142 = ssub.s32 %s139, %s140
      %s143 = sor.u32 %s141, %s142
      %p144 = scmp.eq.s32.totalorder %s143, 0
      %s146 = sadd.s32 %s145, 1
      %s147 = scalar_select %p144, %s145, %s146
      %p150 = pneg %p144
      %p151 = scmp.eq.s32.totalorder %s31, 1
      %p152 = por %p150, %p151
      %p153 = scmp.ne.s32.totalorder %s145, %s148
      %p154 = scmp.eq.s32.totalorder %s31, 0
      %p155 = por %p153, %p154
      %p156 = scmp.ne.s32.totalorder %s145, %s148
      %p157 = scmp.eq.s32.totalorder %s36, 1
      %p158 = por %p156, %p157
      %p159 = scmp.ne.s32.totalorder %s148, %s149
      %p160 = scmp.eq.s32.totalorder %s36, 0
      %p161 = por %p159, %p160
      %p162 = scmp.ne.s32.totalorder %s148, %s149
      %p163 = scmp.eq.s32.totalorder %s37, 1
      %p164 = por %p162, %p163
      %p166 = scmp.ne.s32.totalorder %s149, %s165
      %p167 = scmp.eq.s32.totalorder %s37, 0
      %p168 = por %p166, %p167
      %s169 = ssub.s32 %s38, %s50
      %s170 = ssub.s32 %s39, %s46
      %s171 = sor.u32 %s169, %s170
      %p172 = scmp.eq.s32.totalorder %s171, 0
      %s174 = sadd.s32 %s173, 1
      %s175 = scalar_select %p172, %s173, %s174
      %p178 = pneg %p172
      %p179 = scmp.eq.s32.totalorder %s31, 1
      %p180 = por %p178, %p179
      %p181 = scmp.ne.s32.totalorder %s173, %s176
      %p182 = scmp.eq.s32.totalorder %s31, 0
      %p183 = por %p181, %p182
      %p184 = scmp.ne.s32.totalorder %s173, %s176
      %p185 = scmp.eq.s32.totalorder %s36, 1
      %p186 = por %p184, %p185
      %p187 = scmp.ne.s32.totalorder %s176, %s177
      %p188 = scmp.eq.s32.totalorder %s36, 0
      %p189 = por %p187, %p188
      %p190 = scmp.ne.s32.totalorder %s176, %s177
      %p191 = scmp.eq.s32.totalorder %s37, 1
      %p192 = por %p190, %p191
      %p194 = scmp.ne.s32.totalorder %s177, %s193
      %p195 = scmp.eq.s32.totalorder %s37, 0
      %p196 = por %p194, %p195
      %p197 = scmp.le.s32.totalorder 1, %s31
      %p198 = scmp.lt.s32.totalorder %s31, 3
      %p199 = pnand %p197, %p198
      %p200 = pneg %p199
      // Predicated region
      $region9: #{tpu_custom_call.1} parent=5 // pred_check
        _
      $region10: #{tpu_custom_call.1} parent=5 // pred_check_branch
        %202 = sbr.rel (%p199) target = $region12
      $region11: #{tpu_custom_call.1} parent=5 // pred_region
        %s203 = ssub.s32 %s31, 1
      $region12: #{tpu_custom_call.1} parent=5 // pred_fallthru
        _
      %p204 = scmp.lt.s32.totalorder %s31, 2
      // Predicated region
      $region13: #{tpu_custom_call.1} parent=5 // pred_check
        %p205 = pneg %p204
      $region14: #{tpu_custom_call.1} parent=5 // pred_check_branch
        %207 = sbr.rel (%p205) target = $region16
      $region15: #{tpu_custom_call.1} parent=5 // pred_region
        // Predicated region
        $region17: #{tpu_custom_call.1} parent=15 // pred_check
          %p208 = pneg %p65
        $region18: #{tpu_custom_call.1} parent=15 // pred_check_branch
          %210 = sbr.rel (%p208) target = $region20
        $region19: #{tpu_custom_call.1} parent=15 // pred_region
          %s211 = sand.u32 %s55, 1
          %s212 = scalar_lea.sflag [#allocation5], %s211
          %s213 = sand.u32 %s55, 1
          %s214 = smul.addr %s213, 2
          %s215 = scalar_lea.vmem [#allocation4], %s214
          %217 = vsyncadd %s212, 0
          %s218 = smul.addr %s38, 8
          %s219 = sadd.s32 %s39, %s218
          %s220 = smul.addr %s219, 2
          %s221 = scalar_lea.hbm %s1, %s220
          %s223 = sshll.u32 %s221, 4
          %s224 = int_to_ptr.hbm [resolvable:$true] %s223
          %s225 = sshll.u32 %s215, 4
          %s226 = int_to_ptr.vmem [resolvable:$true] %s225
          %228 = dma.hbm_to_vmem [thread:$0]  %s224, 32, %s226, %s212
        $region20: #{tpu_custom_call.1} parent=15 // pred_fallthru
          _
        // Predicated region
        $region21: #{tpu_custom_call.1} parent=15 // pred_check
          %p229 = pneg %p95
        $region22: #{tpu_custom_call.1} parent=15 // pred_check_branch
          %231 = sbr.rel (%p229) target = $region24
        $region23: #{tpu_custom_call.1} parent=15 // pred_region
          %s232 = sand.u32 %s31, 1
          %s233 = scalar_lea.sflag [#allocation8], %s232
          %s234 = sand.u32 %s85, 1
          %s235 = smul.addr %s234, 2
          %s236 = scalar_lea.vmem [#allocation7], %s235
          %s237 = sadd.s32 %s39, 2
          %239 = vsyncadd %s233, 0
          %s240 = smul.addr %s38, 8
          %s241 = sadd.s32 %s237, %s240
          %s242 = smul.addr %s241, 2
          %s243 = scalar_lea.hbm %s2, %s242
          %s245 = sshll.u32 %s243, 4
          %s246 = int_to_ptr.hbm [resolvable:$true] %s245
          %s247 = sshll.u32 %s236, 4
          %s248 = int_to_ptr.vmem [resolvable:$true] %s247
          %250 = dma.hbm_to_vmem [thread:$0]  %s246, 32, %s248, %s233
        $region24: #{tpu_custom_call.1} parent=15 // pred_fallthru
          _
        // Predicated region
        $region25: #{tpu_custom_call.1} parent=15 // pred_check
          %p251 = pneg %p125
        $region26: #{tpu_custom_call.1} parent=15 // pred_check_branch
          %253 = sbr.rel (%p251) target = $region28
        $region27: #{tpu_custom_call.1} parent=15 // pred_region
          %s254 = sand.u32 %s31, 1
          %s255 = scalar_lea.sflag [#allocation8], %s254
          %s256 = sand.u32 %s115, 1
          %s257 = smul.addr %s256, 2
          %s258 = scalar_lea.vmem [#allocation9], %s257
          %s259 = sadd.s32 %s39, 4
          %261 = vsyncadd %s255, 0
          %s262 = smul.addr %s38, 8
          %s263 = sadd.s32 %s259, %s262
          %s264 = smul.addr %s263, 2
          %s265 = scalar_lea.hbm %s3, %s264
          %s267 = sshll.u32 %s265, 4
          %s268 = int_to_ptr.hbm [resolvable:$true] %s267
          %s269 = sshll.u32 %s258, 4
          %s270 = int_to_ptr.vmem [resolvable:$true] %s269
          %272 = dma.hbm_to_vmem [thread:$0]  %s268, 32, %s270, %s255
        $region28: #{tpu_custom_call.1} parent=15 // pred_fallthru
          _
        // Predicated region
        $region29: #{tpu_custom_call.1} parent=15 // pred_check
          %p273 = pneg %p155
        $region30: #{tpu_custom_call.1} parent=15 // pred_check_branch
          %275 = sbr.rel (%p273) target = $region32
        $region31: #{tpu_custom_call.1} parent=15 // pred_region
          %s276 = sand.u32 %s145, 1
          %s277 = scalar_lea.sflag [#allocation11], %s276
          %s278 = sand.u32 %s145, 1
          %s279 = smul.addr %s278, 2
          %s280 = scalar_lea.vmem [#allocation10], %s279
          %s281 = sadd.s32 %s39, 6
          %283 = vsyncadd %s277, 0
          %s284 = smul.addr %s38, 8
          %s285 = sadd.s32 %s281, %s284
          %s286 = smul.addr %s285, 2
          %s287 = scalar_lea.hbm %s4, %s286
          %s289 = sshll.u32 %s287, 4
          %s290 = int_to_ptr.hbm [resolvable:$true] %s289
          %s291 = sshll.u32 %s280, 4
          %s292 = int_to_ptr.vmem [resolvable:$true] %s291
          %294 = dma.hbm_to_vmem [thread:$0]  %s290, 32, %s292, %s277
        $region32: #{tpu_custom_call.1} parent=15 // pred_fallthru
          _
      $region16: #{tpu_custom_call.1} parent=5 // pred_fallthru
        _
      %p295 = scmp.le.s32.totalorder 1, %s31
      %p296 = scmp.lt.s32.totalorder %s31, 3
      %p297 = pnand %p295, %p296
      %p298 = pneg %p297
      // Predicated region
      $region33: #{tpu_custom_call.1} parent=5 // pred_check
        _
      $region34: #{tpu_custom_call.1} parent=5 // pred_check_branch
        %300 = sbr.rel (%p297) target = $region36
      $region35: #{tpu_custom_call.1} parent=5 // pred_region
        %s301 = ssub.s32 %s31, 1
        %s302 = sand.u32 %s58, 1
        %s303 = scalar_lea.sflag [#allocation5], %s302
        %s304 = sand.u32 %s58, 1
        %s305 = smul.addr %s304, 2
        %s306 = scalar_lea.vmem [#allocation4], %s305
        // Predicated region
        $region37: #{tpu_custom_call.1} parent=35 // pred_check
          %p307 = pneg %p71
        $region38: #{tpu_custom_call.1} parent=35 // pred_check_branch
          %309 = sbr.rel (%p307) target = $region40
        $region39: #{tpu_custom_call.1} parent=35 // pred_region
          %311 = dma.done %s303, 32
        $region40: #{tpu_custom_call.1} parent=35 // pred_fallthru
          _
        %s312 = sand.u32 %s36, 1
        %s313 = scalar_lea.sflag [#allocation8], %s312
        %s314 = sand.u32 %s88, 1
        %s315 = smul.addr %s314, 2
        %s316 = scalar_lea.vmem [#allocation7], %s315
        // Predicated region
        $region41: #{tpu_custom_call.1} parent=35 // pred_check
          %p317 = pneg %p101
        $region42: #{tpu_custom_call.1} parent=35 // pred_check_branch
          %319 = sbr.rel (%p317) target = $region44
        $region43: #{tpu_custom_call.1} parent=35 // pred_region
          %321 = dma.done %s313, 32
        $region44: #{tpu_custom_call.1} parent=35 // pred_fallthru
          _
        %s322 = sand.u32 %s36, 1
        %s323 = scalar_lea.sflag [#allocation8], %s322
        %s324 = sand.u32 %s118, 1
        %s325 = smul.addr %s324, 2
        %s326 = scalar_lea.vmem [#allocation9], %s325
        // Predicated region
        $region45: #{tpu_custom_call.1} parent=35 // pred_check
          %p327 = pneg %p131
        $region46: #{tpu_custom_call.1} parent=35 // pred_check_branch
          %329 = sbr.rel (%p327) target = $region48
        $region47: #{tpu_custom_call.1} parent=35 // pred_region
          %331 = dma.done %s323, 32
        $region48: #{tpu_custom_call.1} parent=35 // pred_fallthru
          _
        %s332 = sand.u32 %s148, 1
        %s333 = scalar_lea.sflag [#allocation11], %s332
        %s334 = sand.u32 %s148, 1
        %s335 = smul.addr %s334, 2
        %s336 = scalar_lea.vmem [#allocation10], %s335
        // Predicated region
        $region49: #{tpu_custom_call.1} parent=35 // pred_check
          %p337 = pneg %p161
        $region50: #{tpu_custom_call.1} parent=35 // pred_check_branch
          %339 = sbr.rel (%p337) target = $region52
        $region51: #{tpu_custom_call.1} parent=35 // pred_region
          %341 = dma.done %s333, 32
        $region52: #{tpu_custom_call.1} parent=35 // pred_fallthru
          _
        %s342 = sand.u32 %s58, 1
        %s343 = scalar_lea.sflag [#allocation5], %s342
        %s344 = sand.u32 %s58, 1
        %s345 = smul.addr %s344, 2
        %s346 = scalar_lea.vmem [#allocation4], %s345
        %p347 = pneg %p71
        %p348 = pneg %p68
        %s349 = sand.u32 %s36, 1
        %s350 = scalar_lea.sflag [#allocation8], %s349
        %s351 = sand.u32 %s88, 1
        %s352 = smul.addr %s351, 2
        %s353 = scalar_lea.vmem [#allocation7], %s352
        %p354 = pneg %p101
        %p355 = pneg %p98
        %s356 = sand.u32 %s36, 1
        %s357 = scalar_lea.sflag [#allocation8], %s356
        %s358 = sand.u32 %s118, 1
        %s359 = smul.addr %s358, 2
        %s360 = scalar_lea.vmem [#allocation9], %s359
        %p361 = pneg %p131
        %p362 = pneg %p128
        %s363 = sand.u32 %s148, 1
        %s364 = scalar_lea.sflag [#allocation11], %s363
        %s365 = sand.u32 %s148, 1
        %s366 = smul.addr %s365, 2
        %s367 = scalar_lea.vmem [#allocation10], %s366
        %p368 = pneg %p161
        %p369 = pneg %p158
        %p370 = pneg %p189
        %p371 = pneg %p186
        %s372 = sand.u32 %s176, 1
        %s373 = scalar_lea.sflag [#allocation6], %s372
        %s374 = sand.u32 %s176, 1
        %s375 = smul.addr %s374, 2
        %s376 = scalar_lea.vmem [#allocation12], %s375
        %s377 = sadd.s32 %s41, 2
        %s378 = sadd.s32 %s41, 4
        %s379 = sadd.s32 %s41, 6
        %v380 = vld [vmem:[%s306] sm:$0x3]
        %s381 = sld [smem:[#allocation3]]
        %v382 = vstv %s381
        %v383 = vmul.f32 %v380, %v382
        %v384 = vld [vmem:[%s316] sm:$0x3]
        %s385 = sld [smem:[#allocation3 + $0x1]]
        %v386 = vstv %s385
        %v387 = vmul.f32 %v384, %v386
        %v388 = vadd.f32 %v383, %v387
        %v389 = vld [vmem:[%s326] sm:$0x3]
        %s390 = sld [smem:[#allocation3 + $0x2]]
        %v391 = vstv %s390
        %v392 = vmul.f32 %v389, %v391
        %v393 = vadd.f32 %v388, %v392
        %v394 = vld [vmem:[%s336] sm:$0x3]
        %s395 = sld [smem:[#allocation3 + $0x3]]
        %v396 = vstv %s395
        %v397 = vmul.f32 %v394, %v396
        %v398 = vadd.f32 %v393, %v397
        %399 = vst [vmem:[%s376] sm:$0x3] %v398
        %s400 = sand.u32 %s176, 1
        %s401 = scalar_lea.sflag [#allocation6], %s400
        %s402 = sand.u32 %s176, 1
        %s403 = smul.addr %s402, 2
        %s404 = scalar_lea.vmem [#allocation12], %s403
        // Predicated region
        $region53: #{tpu_custom_call.1} parent=35 // pred_check
          %p405 = pneg %p186
        $region54: #{tpu_custom_call.1} parent=35 // pred_check_branch
          %407 = sbr.rel (%p405) target = $region56
        $region55: #{tpu_custom_call.1} parent=35 // pred_region
          %409 = vsyncadd %s401, 0
          %s410 = smul.addr %s40, 2
          %s411 = sadd.s32 %s41, %s410
          %s412 = smul.addr %s411, 2
          %s413 = scalar_lea.hbm %s5, %s412
          %s415 = sshll.u32 %s404, 4
          %s416 = int_to_ptr.vmem [resolvable:$true] %s415
          %s417 = sshll.u32 %s413, 4
          %s418 = int_to_ptr.hbm [resolvable:$true] %s417
          %420 = dma.vmem_to_hbm [thread:$0]  %s416, 32, %s418, %s401
        $region56: #{tpu_custom_call.1} parent=35 // pred_fallthru
          _
      $region36: #{tpu_custom_call.1} parent=5 // pred_fallthru
        _
      %p421 = scmp.le.s32.totalorder 2, %s31
      // Predicated region
      $region57: #{tpu_custom_call.1} parent=5 // pred_check
        %p422 = pneg %p421
      $region58: #{tpu_custom_call.1} parent=5 // pred_check_branch
        %424 = sbr.rel (%p422) target = $region60
      $region59: #{tpu_custom_call.1} parent=5 // pred_region
        %s425 = ssub.s32 %s31, 2
        // Predicated region
        $region61: #{tpu_custom_call.1} parent=59 // pred_check
          %p426 = pneg %p192
        $region62: #{tpu_custom_call.1} parent=59 // pred_check_branch
          %428 = sbr.rel (%p426) target = $region64
        $region63: #{tpu_custom_call.1} parent=59 // pred_region
          %s429 = sand.u32 %s177, 1
          %s430 = scalar_lea.sflag [#allocation6], %s429
          %s431 = sand.u32 %s177, 1
          %s432 = smul.addr %s431, 2
          %s433 = scalar_lea.vmem [#allocation12], %s432
          %435 = dma.done %s430, 32
        $region64: #{tpu_custom_call.1} parent=59 // pred_fallthru
          _
      $region60: #{tpu_custom_call.1} parent=5 // pred_fallthru
        _
    $region6: #{tpu_custom_call.1} parent=1 // loop_footer
      %s35 = sadd.s32 1, %s31
    $region7: #{tpu_custom_call.1} parent=1 // loop_footer_branch
      %30 = sbr.rel target = $region3
    $region8: #{tpu_custom_call.1} parent=1 // loop_exit
      _
    %436 = vsyncpa [#allocation5], 1
    %s437 = scalar_lea.sflag [#allocation5], 1
    %438 = vsyncpa %s437, 1
    %439 = vsyncpa [#allocation8], 1
    %s440 = scalar_lea.sflag [#allocation8], 1
    %441 = vsyncpa %s440, 1
    %442 = vsyncpa [#allocation11], 1
    %s443 = scalar_lea.sflag [#allocation11], 1
    %444 = vsyncpa %s443, 1
    %445 = vsyncpa [#allocation6], 1
    %s446 = scalar_lea.sflag [#allocation6], 1
    %447 = vsyncpa %s446, 1

</llo_original>
